<compile_context>
chip_gen: v5e
topology: v5e:2x2
jax: 0.10.0
libtpu: 0.0.40
codegen_flags: <defaults>
</compile_context>

<pallas_src>
import math

import jax
import jax.numpy as jnp
from jax.experimental import pallas as pl
from jax.experimental.pallas import tpu as pltpu

# Below this size a fused XLA copy beats the custom-call boundary by orders of
# magnitude; above it the single DMA is already at the 2x-bytes copy roofline.
_SMALL_COPY_BYTES = 4 << 20  # 4 MiB


def _dma_copy_kernel(src_ref, dst_ref, sem):
    # Direct HBM -> HBM DMA of the whole array; no VMEM staging, no vreg work.
    cp = pltpu.make_async_copy(src_ref, dst_ref, sem)
    cp.start()
    cp.wait()


def _pallas_hbm_copy(x):
    """Materialize a fresh copy of `x` via one whole-array HBM->HBM DMA."""
    nbytes = x.size * x.dtype.itemsize
    return pl.pallas_call(
        _dma_copy_kernel,
        out_shape=jax.ShapeDtypeStruct(x.shape, x.dtype),
        in_specs=[pl.BlockSpec(memory_space=pl.ANY)],
        out_specs=pl.BlockSpec(memory_space=pl.ANY),
        scratch_shapes=[pltpu.SemaphoreType.DMA(())],
        # Advise XLA's scheduler: purely bandwidth-bound (read + write).
        cost_estimate=pl.CostEstimate(
            flops=0, transcendentals=0, bytes_accessed=2 * nbytes),
    )(x)


def identity_forward(input_en, input_de, descriptors, *,
                     materialize=False, force_pallas=False):
    """Pallas implementation of Identity.forward: returns input_de unchanged.

    input_en and descriptors are ignored (as in the reference module) but kept
    in the signature for exact API parity.

    materialize=False (default): zero-cost pass-through — the fastest correct
    implementation (no HBM round-trip, no custom-call fusion barrier).
    materialize=True: produce a fresh buffer (XLA copy for small tensors,
    whole-array HBM->HBM DMA Pallas kernel otherwise).
    force_pallas=True: always use the Pallas DMA kernel (for testing).
    """
    del input_en, descriptors  # unused, per reference semantics

    if not materialize:
        # Highest-value path: Identity needs no kernel at all.
        return input_de

    total = math.prod(input_de.shape) if input_de.shape else 1
    if total == 0:
        return input_de

    nbytes = total * jnp.dtype(input_de.dtype).itemsize
    if nbytes < _SMALL_COPY_BYTES and not force_pallas:
        # Small-tensor cutoff: fused XLA copy beats a custom-call launch.
        return jnp.copy(input_de)

    return _pallas_hbm_copy(input_de)


if __name__ == "__main__":
    key = jax.random.PRNGKey(0)
    k_en, k_de, k_desc = jax.random.split(key, 3)

    # Small shapes consistent with a seg-decoder call site:
    # encoder feature, decoder feature (NCHW), and a descriptor tensor.
    input_en = jax.random.normal(k_en, (2, 4, 16, 16), dtype=jnp.float32)
    input_de = jax.random.normal(k_de, (2, 4, 16, 16), dtype=jnp.float32)
    descriptors = jax.random.normal(k_desc, (2, 4, 8), dtype=jnp.float32)

    # Default (recommended) path: pure pass-through, no kernel.
    out_fast = jax.block_until_ready(
        identity_forward(input_en, input_de, descriptors))
    assert out_fast.shape == input_de.shape
    assert out_fast.dtype == input_de.dtype
    assert bool(jnp.all(out_fast == input_de))

    # Materialized small-tensor path: fused XLA copy (no Pallas launch).
    out_xla = jax.block_until_ready(
        identity_forward(input_en, input_de, descriptors, materialize=True))
    assert out_xla.shape == input_de.shape
    assert out_xla.dtype == input_de.dtype
    assert bool(jnp.all(out_xla == input_de))

    # Exercise the Pallas HBM->HBM DMA kernel once on-device.
    out_dma = jax.block_until_ready(
        identity_forward(input_en, input_de, descriptors,
                         materialize=True, force_pallas=True))
    assert out_dma.shape == input_de.shape
    assert out_dma.dtype == input_de.dtype
    assert bool(jnp.all(out_dma == input_de))

    print("KERNEL_OK")
</pallas_src>

<mosaic_0001>
module attributes {stable_mosaic.version = 11 : i64} {
  func.func @_dma_copy_kernel(%arg0: memref<2x4x16x16xf32, #tpu.memory_space<any>>, %arg1: memref<2x4x16x16xf32, #tpu.memory_space<any>>, %arg2: memref<!tpu.dma_semaphore, #tpu.memory_space<semaphore_mem>>) attributes {dimension_semantics = [], scalar_prefetch = 0 : i64, scratch_operands = 1 : i64, tpu.core_type = #tpu.core_type<tc>} {
    tpu.enqueue_dma source(%arg0 : memref<2x4x16x16xf32, #tpu.memory_space<any>>) target(%arg1 : memref<2x4x16x16xf32, #tpu.memory_space<any>>) target_semaphore(%arg2 : memref<!tpu.dma_semaphore, #tpu.memory_space<semaphore_mem>>)
    tpu.wait_dma2 semaphore(%arg2 : memref<!tpu.dma_semaphore, #tpu.memory_space<semaphore_mem>>) src(%arg0 : memref<2x4x16x16xf32, #tpu.memory_space<any>>) dst(%arg1 : memref<2x4x16x16xf32, #tpu.memory_space<any>>)
    return
  }
}

</mosaic_0001>

<llo_original>
// kernel: tpu_custom_call.1
$region0: #{tpu_custom_call.1}
  #allocation0 [shape = 'u32[]', space=smem, size = 0x4, offset = 0x4, fixed_abs, tag = 'smem constant byte address 0x4 - core index']
  #allocation1 [shape = 'u32[72,128]{1,0:T(1,128)}', space=vmem, size = 0x9000, scoped, tag = 'internal scratch']
  #allocation2 [shape = 's32[1]{0}', space=sflag, size = 0x4, scoped, tag = 'scratch operand']
  #allocation3 [shape = 's32[]', space=sflag, size = 0x4, offset = 0, fixed_abs, tag = 'sflag constant byte address 0x0 - dummy sync flag']
  #allocation4 [shape = 'u32[0]{0}', space=smem, size = 0, offset = 0, fixed_abs, tag = 'smem constant byte address 0x0 - null']
  %s0 = inlined_call_operand.hbm [shape: f32[2,4,16,16], index: 0, kind: input, shape index: {}]
  %s1 = inlined_call_operand.hbm [shape: f32[2,4,16,16], index: 1, kind: output, shape index: {}]
  %s2 = sld [smem:[#allocation0]]
  $region2: #{tpu_custom_call.1} parent=0
    _
  %s4 = ssub.s32 1, %s2
  %s5 = scalar_select 0, %s4, %s2
  %s7 = sshll.u32 1, 14
  %s8 = sxor.u32 4294967295, %s7
  %s10 = sshll.u32 %s0, 4
  %s11 = int_to_ptr.hbm [resolvable:$true] %s10
  %s12 = sshll.u32 %s1, 4
  %s13 = int_to_ptr.hbm [resolvable:$true] %s12
  %16 = dma.general %s11, 2048, %s13, [#allocation2], [#allocation3], [#allocation4], 0, 0
  %s17 = smul.u32 2, 4
  %s18 = smul.u32 %s17, 16
  %s19 = smul.u32 %s18, 1
  %s20 = sshll.u32 %s19, 4
  %21 = dma.done [#allocation2], %s20
  %22 = vsyncmov [#allocation2]
  %s23 = vpop.sfrf %22
  %p24 = scmp.eq.s32.totalorder %s23, 0
  %p25 = pneg %p24
  %27 = shalt.err (%p25)

</llo_original>
